<compile_context>
chip_gen: v7x
topology: tpu7x:2x2x1
jax: 0.10.0
libtpu: 0.0.40
codegen_flags: <defaults>
</compile_context>

<pallas_src>
import jax
import jax.numpy as jnp
from jax.experimental import pallas as pl
from jax.experimental.pallas import tpu as pltpu


def _round_up(x: int, m: int) -> int:
    return ((x + m - 1) // m) * m


def _cdiv(a: int, b: int) -> int:
    return (a + b - 1) // b


def attn_net_kernel(x_ref, w1_ref, b1_ref, w2_ref, b2_ref, a_ref):
    """One (TILE_N, L) slab of rows -> (TILE_N, C) attention logits.

    x streams in at its native dtype and is cast to bf16 in-kernel; both
    matmuls accumulate in f32 on the MXU; bias adds + tanh are f32 (EUP tanh).
    Only the true C output columns are stored (C_pad is internal to the MXU).
    """
    xb = x_ref[...].astype(jnp.bfloat16)
    h = jnp.dot(xb, w1_ref[...], preferred_element_type=jnp.float32)
    h = jnp.tanh(h + b1_ref[...])
    a = jnp.dot(h.astype(w2_ref.dtype), w2_ref[...],
                preferred_element_type=jnp.float32)
    a = a + b2_ref[...]
    c = a_ref.shape[-1]
    a_ref[...] = a[:, :c].astype(a_ref.dtype)


def attn_net_forward(x, w1, b1, w2, b2, *, tile_n=2048):
    """Pallas forward pass. Returns (A, x) exactly like the PyTorch module.

    x:  (..., L)            (leading dims are flattened into a row axis)
    w1: (L, D), b1: (1, D)
    w2: (D, C), b2: (1, C)
    """
    orig_shape = x.shape
    L = orig_shape[-1]
    D = w1.shape[1]
    C = w2.shape[1]

    x2 = x.reshape(-1, L)
    N = x2.shape[0]
    x_bytes = x2.dtype.itemsize

    C_pad = _round_up(C, 128)   # MXU-friendly lane width for the 2nd matmul

    # ---- row-tile selection --------------------------------------------------
    #  * multiple of 16 (bf16 sublane packing)
    #  * >= 2 grid steps when N allows it (v7x: "parallel" grid axis is what
    #    gets sharded across the 2 TensorCores; a 1-step grid idles one TC)
    #  * double-buffered streams + resident weights + kernel temporaries must
    #    fit comfortably inside the smallest (v7x, 64 MiB) VMEM
    TILE_N = max(16, min(_round_up(tile_n, 16), _round_up(N, 16)))
    if N > 16:
        TILE_N = min(TILE_N, max(16, _round_up(_cdiv(N, 2), 16)))

    def vmem_estimate(t):
        stream = 2 * t * L * x_bytes + 2 * t * C * 4            # x in, A out (dbl-buffered)
        weights = 2 * (L * D * 2 + D * C_pad * 2 + D * 4 + C_pad * 4)
        scratch = t * L * 2 + t * D * (4 + 2) + t * C_pad * 4   # bf16 x, f32+bf16 h, f32 a
        return stream + weights + scratch

    VMEM_BUDGET = 36 * 1024 * 1024   # headroom under v7x's 64 MiB physical VMEM
    while TILE_N > 16 and vmem_estimate(TILE_N) > VMEM_BUDGET:
        TILE_N = max(16, _round_up(TILE_N // 2, 16))

    grid = (_cdiv(N, TILE_N),)       # ragged last block handled by Pallas masking

    # ---- cheap one-time parameter plumbing (tiny vs. x traffic) ---------------
    w1b = w1.astype(jnp.bfloat16)
    w2b = jnp.pad(w2, ((0, 0), (0, C_pad - C))).astype(jnp.bfloat16)
    b1f = b1.astype(jnp.float32).reshape(1, D)
    b2f = jnp.pad(b2.astype(jnp.float32).reshape(1, C), ((0, 0), (0, C_pad - C)))

    cost = pl.CostEstimate(
        flops=2 * N * L * D + 2 * N * D * C_pad,
        transcendentals=N * D,
        bytes_accessed=N * L * x_bytes + N * C * 4
        + L * D * 2 + D * C_pad * 2 + (D + C_pad) * 4,
    )

    a = pl.pallas_call(
        attn_net_kernel,
        out_shape=jax.ShapeDtypeStruct((N, C), jnp.float32),
        grid=grid,
        in_specs=[
            # x rows stream through VMEM at native dtype, auto double-buffered.
            pl.BlockSpec((TILE_N, L), lambda i: (i, 0)),
            # Weights / biases: constant index_map -> VMEM-resident across steps.
            pl.BlockSpec((L, D), lambda i: (0, 0)),
            pl.BlockSpec((1, D), lambda i: (0, 0)),
            pl.BlockSpec((D, C_pad), lambda i: (0, 0)),
            pl.BlockSpec((1, C_pad), lambda i: (0, 0)),
        ],
        # Output at the true C width (block last dim == full array dim is legal).
        out_specs=pl.BlockSpec((TILE_N, C), lambda i: (i, 0)),
        compiler_params=pltpu.CompilerParams(
            dimension_semantics=("parallel",),        # N rows are independent
            vmem_limit_bytes=48 * 1024 * 1024,        # safe on v5e/v6e/v7x
        ),
        cost_estimate=cost,
    )(x2, w1b, b1f, w2b, b2f)

    a = a.reshape(*orig_shape[:-1], C)
    return a, x


def init_params(key, L, D, C, dtype=jnp.float32):
    """Deterministic PyTorch-Linear-style init: U(-1/sqrt(fan_in), 1/sqrt(fan_in))."""
    k1, k2, k3, k4 = jax.random.split(key, 4)
    bound1 = 1.0 / (L ** 0.5)
    bound2 = 1.0 / (D ** 0.5)
    w1 = jax.random.uniform(k1, (L, D), dtype, minval=-bound1, maxval=bound1)
    b1 = jax.random.uniform(k2, (1, D), dtype, minval=-bound1, maxval=bound1)
    w2 = jax.random.uniform(k3, (D, C), dtype, minval=-bound2, maxval=bound2)
    b2 = jax.random.uniform(k4, (1, C), dtype, minval=-bound2, maxval=bound2)
    return w1, b1, w2, b2


def _ref_forward(x, w1, b1, w2, b2):
    """Pure-JAX f32 reference (same math as nn.Sequential(Linear, Tanh, Linear))."""
    return jnp.tanh(x @ w1 + b1) @ w2 + b2


if __name__ == "__main__":
    # Small shapes consistent with the module (L=input dim, D=hidden, n_classes)
    N, L, D, C = 16, 64, 32, 4

    key = jax.random.PRNGKey(0)
    kx, kp = jax.random.split(key)
    x = jax.random.normal(kx, (N, L), jnp.float32)
    w1, b1, w2, b2 = init_params(kp, L, D, C)

    fwd = jax.jit(attn_net_forward, static_argnames=("tile_n",))

    # --- single-grid-step case ---
    a, x_out = fwd(x, w1, b1, w2, b2)
    jax.block_until_ready((a, x_out))
    a_ref = _ref_forward(x, w1, b1, w2, b2)
    assert a.shape == (N, C)
    assert x_out.shape == (N, L)
    # bf16 inputs with f32 accumulation -> relaxed tolerance vs the f32 reference
    assert jnp.allclose(a, a_ref, atol=2e-2, rtol=2e-2)
    assert jnp.array_equal(x_out, x)

    # --- multi-grid-step case (tiling + ragged last block, no wrapper pad) ---
    N2 = 40
    x2 = jax.random.normal(jax.random.PRNGKey(1), (N2, L), jnp.float32)
    a2, x2_out = fwd(x2, w1, b1, w2, b2, tile_n=16)   # 3 grid steps, last block ragged
    jax.block_until_ready((a2, x2_out))
    a2_ref = _ref_forward(x2, w1, b1, w2, b2)
    assert a2.shape == (N2, C)
    assert jnp.allclose(a2, a2_ref, atol=2e-2, rtol=2e-2)
    assert jnp.array_equal(x2_out, x2)

    # --- non-multiple-of-8 row count (partial-block read AND masked writeback) ---
    N3 = 19
    x3 = jax.random.normal(jax.random.PRNGKey(2), (N3, L), jnp.float32)
    a3, x3_out = fwd(x3, w1, b1, w2, b2)              # auto tile -> 2 steps, last = 3 rows
    jax.block_until_ready((a3, x3_out))
    a3_ref = _ref_forward(x3, w1, b1, w2, b2)
    assert a3.shape == (N3, C)
    assert jnp.allclose(a3, a3_ref, atol=2e-2, rtol=2e-2)
    assert jnp.array_equal(x3_out, x3)

    print("KERNEL_OK")
</pallas_src>

<mosaic_0001>
module attributes {stable_mosaic.version = 11 : i64} {
  func.func @attn_net_kernel(%arg0: i32, %arg1: memref<16x64xf32, #tpu.memory_space<vmem>>, %arg2: memref<64x32xbf16, #tpu.memory_space<vmem>>, %arg3: memref<1x32xf32, #tpu.memory_space<vmem>>, %arg4: memref<32x128xbf16, #tpu.memory_space<vmem>>, %arg5: memref<1x128xf32, #tpu.memory_space<vmem>>, %arg6: memref<16x4xf32, #tpu.memory_space<vmem>>) attributes {dimension_semantics = [#tpu.dimension_semantics<parallel>], iteration_bounds = array<i64: 1>, scalar_prefetch = 0 : i64, scratch_operands = 0 : i64, tpu.core_type = #tpu.core_type<tc>, window_params = [{transform_indices = @transform_0, window_bounds = array<i64: 16, 64>}, {pipeline_mode = #tpu.pipeline_mode<synchronous>, transform_indices = @transform_1, window_bounds = array<i64: 64, 32>}, {pipeline_mode = #tpu.pipeline_mode<synchronous>, transform_indices = @transform_2, window_bounds = array<i64: 1, 32>}, {pipeline_mode = #tpu.pipeline_mode<synchronous>, transform_indices = @transform_3, window_bounds = array<i64: 32, 128>}, {pipeline_mode = #tpu.pipeline_mode<synchronous>, transform_indices = @transform_4, window_bounds = array<i64: 1, 128>}, {transform_indices = @transform_5, window_bounds = array<i64: 16, 4>}]} {
    %c0 = arith.constant 0 : index
    %c0_0 = arith.constant 0 : index
    %0 = vector.load %arg1[%c0, %c0_0] : memref<16x64xf32, #tpu.memory_space<vmem>>, vector<16x64xf32>
    %1 = arith.truncf %0 : vector<16x64xf32> to vector<16x64xbf16>
    %c0_1 = arith.constant 0 : index
    %c0_2 = arith.constant 0 : index
    %2 = vector.load %arg2[%c0_1, %c0_2] : memref<64x32xbf16, #tpu.memory_space<vmem>>, vector<64x32xbf16>
    %cst = arith.constant dense<0.000000e+00> : vector<16x32xf32>
    %3 = tpu.matmul %1, %2, %cst {dimension_numbers = #tpu.dot_dimension_numbers<[1], [0], [0], [1], [0, 0, 1, 1], [], []>} : vector<16x64xbf16>, vector<64x32xbf16>, vector<16x32xf32> -> vector<16x32xf32>
    %c0_3 = arith.constant 0 : index
    %c0_4 = arith.constant 0 : index
    %4 = vector.load %arg3[%c0_3, %c0_4] : memref<1x32xf32, #tpu.memory_space<vmem>>, vector<1x32xf32>
    %5 = vector.broadcast %4 : vector<1x32xf32> to vector<16x32xf32>
    %6 = arith.addf %3, %5 : vector<16x32xf32>
    %7 = math.tanh %6 : vector<16x32xf32>
    %8 = arith.truncf %7 : vector<16x32xf32> to vector<16x32xbf16>
    %c0_5 = arith.constant 0 : index
    %c0_6 = arith.constant 0 : index
    %9 = vector.load %arg4[%c0_5, %c0_6] : memref<32x128xbf16, #tpu.memory_space<vmem>>, vector<32x128xbf16>
    %cst_7 = arith.constant dense<0.000000e+00> : vector<16x128xf32>
    %10 = tpu.matmul %8, %9, %cst_7 {dimension_numbers = #tpu.dot_dimension_numbers<[1], [0], [0], [1], [0, 0, 1, 1], [], []>} : vector<16x32xbf16>, vector<32x128xbf16>, vector<16x128xf32> -> vector<16x128xf32>
    %c0_8 = arith.constant 0 : index
    %c0_9 = arith.constant 0 : index
    %11 = vector.load %arg5[%c0_8, %c0_9] : memref<1x128xf32, #tpu.memory_space<vmem>>, vector<1x128xf32>
    %12 = vector.broadcast %11 : vector<1x128xf32> to vector<16x128xf32>
    %13 = arith.addf %10, %12 : vector<16x128xf32>
    %14 = vector.extract_strided_slice %13 {offsets = [0, 0], sizes = [16, 4], strides = [1, 1]} : vector<16x128xf32> to vector<16x4xf32>
    %c0_10 = arith.constant 0 : index
    %c0_11 = arith.constant 0 : index
    %15 = vector.load %arg6[%c0_10, %c0_11] : memref<16x4xf32, #tpu.memory_space<vmem>>, vector<16x4xf32>
    tpu.vector_store %arg6[%c0_10, %c0_11], %14 {strides = array<i32>} : memref<16x4xf32, #tpu.memory_space<vmem>>, vector<16x4xf32>,
    return
  }
  func.func @transform_0(%arg0: i32) -> (i32, i32) {
    %c0_i32 = arith.constant 0 : i32
    %c0_i32_0 = arith.constant 0 : i32
    return %arg0, %c0_i32 : i32, i32
  }
  func.func @transform_1(%arg0: i32) -> (i32, i32) {
    %c0_i32 = arith.constant 0 : i32
    %c0_i32_0 = arith.constant 0 : i32
    %c0_i32_1 = arith.constant 0 : i32
    return %c0_i32, %c0_i32_0 : i32, i32
  }
  func.func @transform_2(%arg0: i32) -> (i32, i32) {
    %c0_i32 = arith.constant 0 : i32
    %c0_i32_0 = arith.constant 0 : i32
    %c0_i32_1 = arith.constant 0 : i32
    return %c0_i32, %c0_i32_0 : i32, i32
  }
  func.func @transform_3(%arg0: i32) -> (i32, i32) {
    %c0_i32 = arith.constant 0 : i32
    %c0_i32_0 = arith.constant 0 : i32
    %c0_i32_1 = arith.constant 0 : i32
    return %c0_i32, %c0_i32_0 : i32, i32
  }
  func.func @transform_4(%arg0: i32) -> (i32, i32) {
    %c0_i32 = arith.constant 0 : i32
    %c0_i32_0 = arith.constant 0 : i32
    %c0_i32_1 = arith.constant 0 : i32
    return %c0_i32, %c0_i32_0 : i32, i32
  }
  func.func @transform_5(%arg0: i32) -> (i32, i32) {
    %c0_i32 = arith.constant 0 : i32
    %c0_i32_0 = arith.constant 0 : i32
    return %arg0, %c0_i32 : i32, i32
  }
}

</mosaic_0001>

<llo_original>
// kernel: attn_net_forward.1
$region0: #{attn_net_forward.1}
  #allocation0 [shape = 'u32[]', space=smem, size = 0x4, offset = 0x4, fixed_abs, tag = 'smem constant byte address 0x4 - core index']
  #allocation1 [shape = 'u32[144,128]{1,0:T(1,128)}', space=vmem, size = 0x12000, scoped, tag = 'internal scratch']
  %s0 = inlined_call_operand.vmem [shape: f32[16,64], index: 0, kind: input, shape index: {}]
  %s1 = inlined_call_operand.vmem [shape: bf16[64,32], index: 1, kind: input, shape index: {}]
  %s2 = inlined_call_operand.vmem [shape: f32[1,32], index: 2, kind: input, shape index: {}]
  %s3 = inlined_call_operand.vmem [shape: bf16[32,128], index: 3, kind: input, shape index: {}]
  %s4 = inlined_call_operand.vmem [shape: f32[1,128], index: 4, kind: input, shape index: {}]
  %s5 = inlined_call_operand.vmem [shape: f32[16,4], index: 5, kind: output, shape index: {}]
  %s6 = sld [smem:[#allocation0]]
  $region30: #{attn_net_forward.1} parent=0
    _
  %s8 = ssub.s32 1, %s6
  %s9 = scalar_select 0, %s8, %s6
  // Predicated region
  $region2: #{attn_net_forward.1} parent=0 // pred_check
    _
  $region3: #{attn_net_forward.1} parent=0 // pred_check_branch
    %11 = sbr.rel (0) target = $region5
  $region4: #{attn_net_forward.1} parent=0 // pred_region
    _
  $region5: #{attn_net_forward.1} parent=0 // pred_fallthru
    _
  // Predicated region
  $region6: #{attn_net_forward.1} parent=0 // pred_check
    _
  $region7: #{attn_net_forward.1} parent=0 // pred_check_branch
    %13 = sbr.rel (0) target = $region9
  $region8: #{attn_net_forward.1} parent=0 // pred_region
    _
  $region9: #{attn_net_forward.1} parent=0 // pred_fallthru
    _
  // Predicated region
  $region10: #{attn_net_forward.1} parent=0 // pred_check
    _
  $region11: #{attn_net_forward.1} parent=0 // pred_check_branch
    %15 = sbr.rel (0) target = $region13
  $region12: #{attn_net_forward.1} parent=0 // pred_region
    _
  $region13: #{attn_net_forward.1} parent=0 // pred_fallthru
    _
  // Predicated region
  $region14: #{attn_net_forward.1} parent=0 // pred_check
    _
  $region15: #{attn_net_forward.1} parent=0 // pred_check_branch
    %17 = sbr.rel (0) target = $region17
  $region16: #{attn_net_forward.1} parent=0 // pred_region
    _
  $region17: #{attn_net_forward.1} parent=0 // pred_fallthru
    _
  // Predicated region
  $region18: #{attn_net_forward.1} parent=0 // pred_check
    _
  $region19: #{attn_net_forward.1} parent=0 // pred_check_branch
    %19 = sbr.rel (0) target = $region21
  $region20: #{attn_net_forward.1} parent=0 // pred_region
    _
  $region21: #{attn_net_forward.1} parent=0 // pred_fallthru
    _
  %v21 = vld [vmem:[%s0] sm:$0xff]
  %v22 = vld [vmem:[%s0 + $0x8] sm:$0xff]
  %v23 = vpack.c.bf16 %v22, %v21
  %v24 = vld [vmem:[%s1] sm:$0xf]
  %v25 = vld [vmem:[%s1 + $0x4] sm:$0xf]
  %v26 = vld [vmem:[%s1 + $0x8] sm:$0xf]
  %v27 = vld [vmem:[%s1 + $0xc] sm:$0xf]
  %v28 = vld [vmem:[%s1 + $0x10] sm:$0xf]
  %v29 = vld [vmem:[%s1 + $0x14] sm:$0xf]
  %v30 = vld [vmem:[%s1 + $0x18] sm:$0xf]
  %v31 = vld [vmem:[%s1 + $0x1c] sm:$0xf]
  %v32 = vld [vmem:[%s2] sm:$0x1]
  %v34 = vlaneseq
  %v35 = vshrl.u32 %v34, 7
  %v36 = vsub.s32 0, %v35
  %v37 = vrot.slane %v32, %v36
  %v47 = vunpack.c.l.b16 %v24
  %v48 = vunpack.c.l.b16 %v25
  %v49 = vunpack.c.l.b16 %v26
  %v50 = vunpack.c.l.b16 %v27
  %v51 = vunpack.c.l.b16 %v28
  %v52 = vunpack.c.l.b16 %v29
  %v53 = vunpack.c.l.b16 %v30
  %v54 = vunpack.c.l.b16 %v31
  %v55 = vpack.c.b16 %v48, %v47
  %v56 = vpack.c.b16 %v50, %v49
  %v57 = vpack.c.b16 %v52, %v51
  %v58 = vpack.c.b16 %v54, %v53
  %vm63 = vcmask 523264
  %v65 = vsel %vm63, %v23, 0
  %67 = vmatprep.subr.bf16.mxu0 0
  %68 = vmatpush1.bf16.msra.mxu0 %v55
  %69 = vmatprep.subr.bf16.mxu0 0
  %70 = vmatpush1.bf16.msra.mxu0 %v56
  %71 = vmatprep.subr.bf16.mxu0 0
  %72 = vmatpush1.bf16.msra.mxu0 %v57
  %73 = vmatprep.subr.bf16.mxu0 0
  %74 = vmatpush1.bf16.msra.mxu0 %v58
  %75 = vmatprep.subr.bf16.mxu0 0
  %76 = vmatpush1.bf16.msra.mxu0 0
  %77 = vmatprep.subr.bf16.mxu0 0
  %78 = vmatpush1.bf16.msra.mxu0 0
  %79 = vmatprep.subr.bf16.mxu0 0
  %80 = vmatpush1.bf16.msra.mxu0 0
  %81 = vmatprep.subr.bf16.mxu0 0
  %82 = vmatpush1.bf16.msra.mxu0 0
  %83 = vmatprep.subr.bf16.mxu0 0
  %84 = vmatpush1.bf16.msra.mxu0 0
  %85 = vmatprep.subr.bf16.mxu0 0
  %86 = vmatpush1.bf16.msra.mxu0 0
  %87 = vmatprep.subr.bf16.mxu0 0
  %88 = vmatpush1.bf16.msra.mxu0 0
  %89 = vmatprep.subr.bf16.mxu0 0
  %90 = vmatpush1.bf16.msra.mxu0 0
  %91 = vmatprep.subr.bf16.mxu0 0
  %92 = vmatpush1.bf16.msra.mxu0 0
  %93 = vmatprep.subr.bf16.mxu0 0
  %94 = vmatpush1.bf16.msra.mxu0 0
  %95 = vmatprep.subr.bf16.mxu0 0
  %96 = vmatpush1.bf16.msra.mxu0 0
  %97 = vmatprep.subr.bf16.mxu0 0
  %98 = vmatpush1.bf16.msra.mxu0 0
  %99 = vmatprep.mubr.bf16.mxu0 0
  %100 = vmatmul.mubr.bf16.gmra.mrb[0].mxu0 %v65
  %v101 = vpop.f32.mrb[0].mxu0
  %v102 = vadd.f32 %v37, %v101
  %v103 = vpop.f32.mrb[0].mxu0
  %v104 = vpop.f32.mrb[0].mxu0
  %v105 = vadd.f32 %v37, %v104
  %v106 = vpop.f32.mrb[0].mxu0
  %107 = vdwg.mxu0
  %v108 = vtanh.pop %v102
  %v109 = vtanh.pop %v105
  %v110 = vpack.c.bf16 %v109, %v108
  %v111 = vld [vmem:[%s3] sm:$0xf]
  %v112 = vld [vmem:[%s3 + $0x4] sm:$0xf]
  %v113 = vld [vmem:[%s3 + $0x8] sm:$0xf]
  %v114 = vld [vmem:[%s3 + $0xc] sm:$0xf]
  %v115 = vld [vmem:[%s4] sm:$0x1]
  %v117 = vlaneseq
  %v118 = vshrl.u32 %v117, 7
  %v119 = vsub.s32 0, %v118
  %v120 = vrot.slane %v115, %v119
  %v126 = vunpack.c.l.b16 %v111
  %v127 = vunpack.c.l.b16 %v112
  %v128 = vunpack.c.l.b16 %v113
  %v129 = vunpack.c.l.b16 %v114
  %v130 = vpack.c.b16 %v127, %v126
  %v131 = vpack.c.b16 %v129, %v128
  %vm134 = vcmask 261120
  %v136 = vsel %vm134, %v110, 0
  %138 = vmatprep.subr.bf16.mxu0 0
  %139 = vmatpush1.bf16.msra.mxu0 %v130
  %140 = vmatprep.subr.bf16.mxu0 0
  %141 = vmatpush1.bf16.msra.mxu0 %v131
  %142 = vmatprep.subr.bf16.mxu0 0
  %143 = vmatpush1.bf16.msra.mxu0 0
  %144 = vmatprep.subr.bf16.mxu0 0
  %145 = vmatpush1.bf16.msra.mxu0 0
  %146 = vmatprep.subr.bf16.mxu0 0
  %147 = vmatpush1.bf16.msra.mxu0 0
  %148 = vmatprep.subr.bf16.mxu0 0
  %149 = vmatpush1.bf16.msra.mxu0 0
  %150 = vmatprep.subr.bf16.mxu0 0
  %151 = vmatpush1.bf16.msra.mxu0 0
  %152 = vmatprep.subr.bf16.mxu0 0
  %153 = vmatpush1.bf16.msra.mxu0 0
  %154 = vmatprep.subr.bf16.mxu0 0
  %155 = vmatpush1.bf16.msra.mxu0 0
  %156 = vmatprep.subr.bf16.mxu0 0
  %157 = vmatpush1.bf16.msra.mxu0 0
  %158 = vmatprep.subr.bf16.mxu0 0
  %159 = vmatpush1.bf16.msra.mxu0 0
  %160 = vmatprep.subr.bf16.mxu0 0
  %161 = vmatpush1.bf16.msra.mxu0 0
  %162 = vmatprep.subr.bf16.mxu0 0
  %163 = vmatpush1.bf16.msra.mxu0 0
  %164 = vmatprep.subr.bf16.mxu0 0
  %165 = vmatpush1.bf16.msra.mxu0 0
  %166 = vmatprep.subr.bf16.mxu0 0
  %167 = vmatpush1.bf16.msra.mxu0 0
  %168 = vmatprep.subr.bf16.mxu0 0
  %169 = vmatpush1.bf16.msra.mxu0 0
  %170 = vmatprep.mubr.bf16.mxu0 0
  %171 = vmatmul.mubr.bf16.gmra.mrb[0].mxu0 %v136
  %v172 = vpop.f32.mrb[0].mxu0
  %v173 = vadd.f32 %v120, %v172
  %v174 = vpop.f32.mrb[0].mxu0
  %v175 = vpop.f32.mrb[0].mxu0
  %v176 = vadd.f32 %v120, %v175
  %v177 = vpop.f32.mrb[0].mxu0
  %178 = vdwg.mxu0
  %vm179 = vcmask 31744
  %180 = vst.msk [vmem:[%s5] sm:$0xff] %vm179, %v173
  %181 = vst.msk [vmem:[%s5 + $0x8] sm:$0xff] %vm179, %v176
  // Predicated region
  $region22: #{attn_net_forward.1} parent=0 // pred_check
    _
  $region23: #{attn_net_forward.1} parent=0 // pred_check_branch
    %183 = sbr.rel (0) target = $region25
  $region24: #{attn_net_forward.1} parent=0 // pred_region
    _
  $region25: #{attn_net_forward.1} parent=0 // pred_fallthru
    _
  // Predicated region
  $region26: #{attn_net_forward.1} parent=0 // pred_check
    _
  $region27: #{attn_net_forward.1} parent=0 // pred_check_branch
    %185 = sbr.rel (0) target = $region29
  $region28: #{attn_net_forward.1} parent=0 // pred_region
    _
  $region29: #{attn_net_forward.1} parent=0 // pred_fallthru
    _

</llo_original>
